<compile_context>
chip_gen: v7x
topology: tpu7x:2x2x1
jax: 0.10.0
libtpu: 0.0.40
codegen_flags: <defaults>
</compile_context>

<pallas_src>
import jax
import jax.numpy as jnp
from jax.experimental import pallas as pl
from jax.experimental.pallas import tpu as pltpu


def item_embedding_kernel(item_ref, wr_ref, wg_ref, out_ref):
    """One batch tile.

    item_ref: (TB, P*FP) int32 -- P padded feature rows packed per VMEM row.
    wr_ref:   (P, FP, OUT_W) f32 -- rate embedding table, block-placed.
    wg_ref:   (P, FP, OUT_W) f32 -- genre linear weight, block-placed.
    out_ref:  (TB, OUT_W) f32    -- OUT_W = P * 2D (128 lanes when possible).
    """
    item = item_ref[...]
    wr = wr_ref[...]
    wg = wg_ref[...]
    rows = item.shape[0]
    p_pack, fp, out_w = wr.shape
    two_d = out_w // p_pack
    d = two_d // 2

    fcol = jax.lax.broadcasted_iota(jnp.int32, (rows, fp), 1)      # feature cols
    ocol = jax.lax.broadcasted_iota(jnp.int32, (rows, out_w), 1)   # output cols

    acc = jnp.zeros((rows, out_w), jnp.float32)
    for p in range(p_pack):  # static unroll over packed sub-rows
        h = item[:, p * fp:(p + 1) * fp]            # (rows, FP) int32, 32-aligned
        hf = h.astype(jnp.float32)
        rate_idx = h[:, 0:1]                        # (rows, 1)

        # Rate embedding as one-hot @ table (num_rate is tiny; wr rows beyond
        # num_rate are zero so out-of-range indices yield a zero embedding).
        # TODO(synk): switch to a scalar-prefetch gather if num_rate grows to
        # real embedding-table sizes.
        onehot = (fcol == rate_idx).astype(jnp.float32)
        acc = acc + jnp.dot(onehot, wr[p], preferred_element_type=jnp.float32)

        # Genre linear.  Padding columns are zero, so full-row sum minus the
        # rate column is exactly sum(genre flags) (small ints -> exact fp).
        denom = jnp.sum(hf, axis=1, keepdims=True) - hf[:, 0:1]
        inv = pl.reciprocal(denom)                  # exact; EUP slot
        g = jnp.dot(hf, wg[p], preferred_element_type=jnp.float32)
        in_genre = jnp.logical_and(ocol >= p * two_d + d, ocol < (p + 1) * two_d)
        acc = acc + jnp.where(in_genre, g * inv, g)

    out_ref[...] = acc


def item_embedding_ml(item_fea, rate_table, genre_weight_t, block_rows=1024):
    """item_fea: (B, 1+num_genre) int; rate_table: (num_rate, D) f32;
    genre_weight_t: (num_genre, D) f32  (== torch Linear.weight.T)."""
    B, n_feat = item_fea.shape
    num_rate, D = rate_table.shape
    num_genre = genre_weight_t.shape[0]
    assert n_feat == 1 + num_genre
    out_dim = 2 * D

    # Padded feature width -> no offset-1 lane slices inside the kernel.
    fp = ((max(n_feat, num_rate) + 31) // 32) * 32
    # Pack P batch rows per VMEM row so the output last dim is 128 (lane-dense).
    p_pack = 128 // out_dim if (out_dim <= 128 and 128 % out_dim == 0) else 1
    out_w = p_pack * out_dim

    # Batch tiling: `block_rows` packed rows per grid step.  VMEM per step
    # ~ (p_pack*fp + out_w) * 4B * block_rows * 2 (double buffer) ~= 1.5 MiB at
    # block_rows=1024 -- safe for v7x's 64 MiB physical / 32 MiB scoped VMEM
    # as well as v5e/v6e's 128 MiB.
    block_rows = max(8, (block_rows // 8) * 8)
    rows_needed = -(-B // p_pack)
    tb = max(8, min(block_rows, ((rows_needed + 7) // 8) * 8))
    grid_n = -(-rows_needed // tb)
    rows_pad = grid_n * tb
    b_pad = rows_pad * p_pack

    # Host-side layout plumbing (row-major pad + reshape only).
    item_p = jnp.zeros((b_pad, fp), jnp.int32)
    item_p = item_p.at[:B, :n_feat].set(item_fea.astype(jnp.int32))
    item_packed = item_p.reshape(rows_pad, p_pack * fp)

    # Fused block weights: packed sub-row p writes output lanes [p*2D, (p+1)*2D).
    wr = jnp.zeros((p_pack, fp, out_w), jnp.float32)
    wg = jnp.zeros((p_pack, fp, out_w), jnp.float32)
    for p in range(p_pack):
        wr = wr.at[p, :num_rate, p * out_dim:p * out_dim + D].set(
            rate_table.astype(jnp.float32))
        wg = wg.at[p, 1:1 + num_genre, p * out_dim + D:(p + 1) * out_dim].set(
            genre_weight_t.astype(jnp.float32))

    out_packed = pl.pallas_call(
        item_embedding_kernel,
        out_shape=jax.ShapeDtypeStruct((rows_pad, out_w), jnp.float32),
        grid_spec=pltpu.PrefetchScalarGridSpec(
            num_scalar_prefetch=0,
            grid=(grid_n,),
            in_specs=[
                pl.BlockSpec((tb, p_pack * fp), lambda i: (i, 0)),
                pl.BlockSpec((p_pack, fp, out_w), lambda i: (0, 0, 0)),
                pl.BlockSpec((p_pack, fp, out_w), lambda i: (0, 0, 0)),
            ],
            out_specs=pl.BlockSpec((tb, out_w), lambda i: (i, 0)),
        ),
        compiler_params=pltpu.CompilerParams(
            dimension_semantics=("parallel",)),
    )(item_packed, wr, wg)

    return out_packed.reshape(b_pad, out_dim)[:B]


if __name__ == "__main__":
    # config: num_rate=6, num_genre=25, embedding_dim=32 (MovieLens MetaCluster).
    # NOTE: tiny B=8 is kernel-launch-overhead bound; the tiled/parallel design
    # only pays off at production batch sizes.
    num_rate, num_genre, D = 6, 25, 32
    B = 8

    key = jax.random.PRNGKey(0)
    k_rate_tbl, k_genre_w, k_idx, k_multi = jax.random.split(key, 4)

    rate_table = jax.random.normal(k_rate_tbl, (num_rate, D), dtype=jnp.float32)
    # torch.nn.Linear weight is (out=D, in=num_genre); kernel takes its transpose.
    genre_weight = jax.random.normal(k_genre_w, (D, num_genre), dtype=jnp.float32) * 0.1
    genre_weight_t = genre_weight.T

    # item_fea: column 0 is rate index, columns 1..25 are multi-hot genre flags.
    rate_idx = jax.random.randint(k_idx, (B, 1), 0, num_rate, dtype=jnp.int32)
    genre_hot = jax.random.bernoulli(k_multi, 0.3, (B, num_genre)).astype(jnp.int32)
    genre_hot = genre_hot.at[:, 0].set(1)  # avoid 0/0 rows (degenerate in torch too)
    item_fea = jnp.concatenate([rate_idx, genre_hot], axis=1).astype(jnp.int32)

    out = item_embedding_ml(item_fea, rate_table, genre_weight_t)
    out = jax.block_until_ready(out)

    # Pure-JAX reference check.
    rate_emb_ref = rate_table[item_fea[:, 0]]
    genre_f = item_fea[:, 1:1 + num_genre].astype(jnp.float32)
    genre_emb_ref = (genre_f @ genre_weight_t) / jnp.sum(genre_f, axis=1, keepdims=True)
    ref = jnp.concatenate([rate_emb_ref, genre_emb_ref], axis=1)

    assert out.shape == (B, 2 * D)
    assert jnp.allclose(out, ref, atol=1e-5), "mismatch vs reference"
    print("KERNEL_OK")
</pallas_src>

<mosaic_0001>
module attributes {stable_mosaic.version = 11 : i64} {
  func.func @item_embedding_kernel(%arg0: i32, %arg1: memref<8x64xi32, #tpu.memory_space<vmem>>, %arg2: memref<2x32x128xf32, #tpu.memory_space<vmem>>, %arg3: memref<2x32x128xf32, #tpu.memory_space<vmem>>, %arg4: memref<8x128xf32, #tpu.memory_space<vmem>>) attributes {dimension_semantics = [#tpu.dimension_semantics<parallel>], iteration_bounds = array<i64: 1>, scalar_prefetch = 0 : i64, scratch_operands = 0 : i64, tpu.core_type = #tpu.core_type<tc>, window_params = [{transform_indices = @transform_0, window_bounds = array<i64: 8, 64>}, {pipeline_mode = #tpu.pipeline_mode<synchronous>, transform_indices = @transform_1, window_bounds = array<i64: 2, 32, 128>}, {pipeline_mode = #tpu.pipeline_mode<synchronous>, transform_indices = @transform_2, window_bounds = array<i64: 2, 32, 128>}, {transform_indices = @transform_3, window_bounds = array<i64: 8, 128>}]} {
    %c0 = arith.constant 0 : index
    %c0_0 = arith.constant 0 : index
    %0 = vector.load %arg1[%c0, %c0_0] : memref<8x64xi32, #tpu.memory_space<vmem>>, vector<8x64xi32>
    %c0_1 = arith.constant 0 : index
    %c0_2 = arith.constant 0 : index
    %c0_3 = arith.constant 0 : index
    %1 = vector.load %arg2[%c0_1, %c0_2, %c0_3] : memref<2x32x128xf32, #tpu.memory_space<vmem>>, vector<2x32x128xf32>
    %c0_4 = arith.constant 0 : index
    %c0_5 = arith.constant 0 : index
    %c0_6 = arith.constant 0 : index
    %2 = vector.load %arg3[%c0_4, %c0_5, %c0_6] : memref<2x32x128xf32, #tpu.memory_space<vmem>>, vector<2x32x128xf32>
    %3 = tpu.iota {dimensions = array<i32: 1>} : vector<8x32xi32>
    %4 = tpu.iota {dimensions = array<i32: 1>} : vector<8x128xi32>
    %cst = arith.constant 0.000000e+00 : f32
    %5 = vector.broadcast %cst : f32 to vector<8x128xf32>
    %6 = vector.extract_strided_slice %0 {offsets = [0, 0], sizes = [8, 32], strides = [1, 1]} : vector<8x64xi32> to vector<8x32xi32>
    %7 = arith.sitofp %6 : vector<8x32xi32> to vector<8x32xf32>
    %8 = vector.extract_strided_slice %6 {offsets = [0, 0], sizes = [8, 1], strides = [1, 1]} : vector<8x32xi32> to vector<8x1xi32>
    %9 = vector.broadcast %8 : vector<8x1xi32> to vector<8x32xi32>
    %10 = arith.cmpi eq, %3, %9 : vector<8x32xi32>
    %11 = arith.extui %10 : vector<8x32xi1> to vector<8x32xi32>
    %12 = arith.sitofp %11 : vector<8x32xi32> to vector<8x32xf32>
    %13 = vector.extract_strided_slice %1 {offsets = [0, 0, 0], sizes = [1, 32, 128], strides = [1, 1, 1]} : vector<2x32x128xf32> to vector<1x32x128xf32>
    %14 = vector.shape_cast %13 : vector<1x32x128xf32> to vector<32x128xf32>
    %cst_7 = arith.constant dense<0.000000e+00> : vector<8x128xf32>
    %15 = tpu.matmul %12, %14, %cst_7 {dimension_numbers = #tpu.dot_dimension_numbers<[1], [0], [0], [1], [0, 0, 1, 1], [], []>} : vector<8x32xf32>, vector<32x128xf32>, vector<8x128xf32> -> vector<8x128xf32>
    %16 = arith.addf %5, %15 : vector<8x128xf32>
    %cst_8 = arith.constant dense<0.000000e+00> : vector<8xf32>
    %17 = vector.multi_reduction <add>, %7, %cst_8 [1] : vector<8x32xf32> to vector<8xf32>
    %18 = vector.shape_cast %17 : vector<8xf32> to vector<8x1xf32>
    %19 = vector.extract_strided_slice %7 {offsets = [0, 0], sizes = [8, 1], strides = [1, 1]} : vector<8x32xf32> to vector<8x1xf32>
    %20 = arith.subf %18, %19 : vector<8x1xf32>
    %21 = tpu.reciprocal %20 : vector<8x1xf32> -> vector<8x1xf32>
    %22 = vector.extract_strided_slice %2 {offsets = [0, 0, 0], sizes = [1, 32, 128], strides = [1, 1, 1]} : vector<2x32x128xf32> to vector<1x32x128xf32>
    %23 = vector.shape_cast %22 : vector<1x32x128xf32> to vector<32x128xf32>
    %cst_9 = arith.constant dense<0.000000e+00> : vector<8x128xf32>
    %24 = tpu.matmul %7, %23, %cst_9 {dimension_numbers = #tpu.dot_dimension_numbers<[1], [0], [0], [1], [0, 0, 1, 1], [], []>} : vector<8x32xf32>, vector<32x128xf32>, vector<8x128xf32> -> vector<8x128xf32>
    %c32_i32 = arith.constant 32 : i32
    %25 = vector.broadcast %c32_i32 : i32 to vector<8x128xi32>
    %26 = arith.cmpi sge, %4, %25 : vector<8x128xi32>
    %c64_i32 = arith.constant 64 : i32
    %27 = vector.broadcast %c64_i32 : i32 to vector<8x128xi32>
    %28 = arith.cmpi slt, %4, %27 : vector<8x128xi32>
    %29 = arith.andi %26, %28 : vector<8x128xi1>
    %30 = vector.broadcast %21 : vector<8x1xf32> to vector<8x128xf32>
    %31 = arith.mulf %24, %30 : vector<8x128xf32>
    %32 = arith.select %29, %31, %24 : vector<8x128xi1>, vector<8x128xf32>
    %33 = arith.addf %16, %32 : vector<8x128xf32>
    %34 = vector.extract_strided_slice %0 {offsets = [0, 32], sizes = [8, 32], strides = [1, 1]} : vector<8x64xi32> to vector<8x32xi32>
    %35 = arith.sitofp %34 : vector<8x32xi32> to vector<8x32xf32>
    %36 = vector.extract_strided_slice %34 {offsets = [0, 0], sizes = [8, 1], strides = [1, 1]} : vector<8x32xi32> to vector<8x1xi32>
    %37 = vector.broadcast %36 : vector<8x1xi32> to vector<8x32xi32>
    %38 = arith.cmpi eq, %3, %37 : vector<8x32xi32>
    %39 = arith.extui %38 : vector<8x32xi1> to vector<8x32xi32>
    %40 = arith.sitofp %39 : vector<8x32xi32> to vector<8x32xf32>
    %41 = vector.extract_strided_slice %1 {offsets = [1, 0, 0], sizes = [1, 32, 128], strides = [1, 1, 1]} : vector<2x32x128xf32> to vector<1x32x128xf32>
    %42 = vector.shape_cast %41 : vector<1x32x128xf32> to vector<32x128xf32>
    %cst_10 = arith.constant dense<0.000000e+00> : vector<8x128xf32>
    %43 = tpu.matmul %40, %42, %cst_10 {dimension_numbers = #tpu.dot_dimension_numbers<[1], [0], [0], [1], [0, 0, 1, 1], [], []>} : vector<8x32xf32>, vector<32x128xf32>, vector<8x128xf32> -> vector<8x128xf32>
    %44 = arith.addf %33, %43 : vector<8x128xf32>
    %cst_11 = arith.constant dense<0.000000e+00> : vector<8xf32>
    %45 = vector.multi_reduction <add>, %35, %cst_11 [1] : vector<8x32xf32> to vector<8xf32>
    %46 = vector.shape_cast %45 : vector<8xf32> to vector<8x1xf32>
    %47 = vector.extract_strided_slice %35 {offsets = [0, 0], sizes = [8, 1], strides = [1, 1]} : vector<8x32xf32> to vector<8x1xf32>
    %48 = arith.subf %46, %47 : vector<8x1xf32>
    %49 = tpu.reciprocal %48 : vector<8x1xf32> -> vector<8x1xf32>
    %50 = vector.extract_strided_slice %2 {offsets = [1, 0, 0], sizes = [1, 32, 128], strides = [1, 1, 1]} : vector<2x32x128xf32> to vector<1x32x128xf32>
    %51 = vector.shape_cast %50 : vector<1x32x128xf32> to vector<32x128xf32>
    %cst_12 = arith.constant dense<0.000000e+00> : vector<8x128xf32>
    %52 = tpu.matmul %35, %51, %cst_12 {dimension_numbers = #tpu.dot_dimension_numbers<[1], [0], [0], [1], [0, 0, 1, 1], [], []>} : vector<8x32xf32>, vector<32x128xf32>, vector<8x128xf32> -> vector<8x128xf32>
    %c96_i32 = arith.constant 96 : i32
    %53 = vector.broadcast %c96_i32 : i32 to vector<8x128xi32>
    %54 = arith.cmpi sge, %4, %53 : vector<8x128xi32>
    %c128_i32 = arith.constant 128 : i32
    %55 = vector.broadcast %c128_i32 : i32 to vector<8x128xi32>
    %56 = arith.cmpi slt, %4, %55 : vector<8x128xi32>
    %57 = arith.andi %54, %56 : vector<8x128xi1>
    %58 = vector.broadcast %49 : vector<8x1xf32> to vector<8x128xf32>
    %59 = arith.mulf %52, %58 : vector<8x128xf32>
    %60 = arith.select %57, %59, %52 : vector<8x128xi1>, vector<8x128xf32>
    %61 = arith.addf %44, %60 : vector<8x128xf32>
    %c0_13 = arith.constant 0 : index
    %c0_14 = arith.constant 0 : index
    %62 = vector.load %arg4[%c0_13, %c0_14] : memref<8x128xf32, #tpu.memory_space<vmem>>, vector<8x128xf32>
    tpu.vector_store %arg4[%c0_13, %c0_14], %61 {strides = array<i32>} : memref<8x128xf32, #tpu.memory_space<vmem>>, vector<8x128xf32>,
    return
  }
  func.func @transform_0(%arg0: i32) -> (i32, i32) {
    %c0_i32 = arith.constant 0 : i32
    %c0_i32_0 = arith.constant 0 : i32
    return %arg0, %c0_i32 : i32, i32
  }
  func.func @transform_1(%arg0: i32) -> (i32, i32, i32) {
    %c0_i32 = arith.constant 0 : i32
    %c0_i32_0 = arith.constant 0 : i32
    %c0_i32_1 = arith.constant 0 : i32
    %c0_i32_2 = arith.constant 0 : i32
    return %c0_i32, %c0_i32_0, %c0_i32_1 : i32, i32, i32
  }
  func.func @transform_2(%arg0: i32) -> (i32, i32, i32) {
    %c0_i32 = arith.constant 0 : i32
    %c0_i32_0 = arith.constant 0 : i32
    %c0_i32_1 = arith.constant 0 : i32
    %c0_i32_2 = arith.constant 0 : i32
    return %c0_i32, %c0_i32_0, %c0_i32_1 : i32, i32, i32
  }
  func.func @transform_3(%arg0: i32) -> (i32, i32) {
    %c0_i32 = arith.constant 0 : i32
    %c0_i32_0 = arith.constant 0 : i32
    return %arg0, %c0_i32 : i32, i32
  }
}

</mosaic_0001>

<llo_original>
// kernel: tpu_custom_call.1
$region0: #{tpu_custom_call.1}
  #allocation0 [shape = 'u32[]', space=smem, size = 0x4, offset = 0x4, fixed_abs, tag = 'smem constant byte address 0x4 - core index']
  #allocation1 [shape = 'u32[144,128]{1,0:T(1,128)}', space=vmem, size = 0x12000, scoped, tag = 'internal scratch']
  %s0 = inlined_call_operand.hbm [shape: s32[8,64], index: 0, kind: input, shape index: {}]
  %s1 = inlined_call_operand.hbm [shape: f32[2,32,128], index: 1, kind: input, shape index: {}]
  %s2 = inlined_call_operand.hbm [shape: f32[2,32,128], index: 2, kind: input, shape index: {}]
  %s3 = inlined_call_operand.hbm [shape: f32[8,128], index: 3, kind: output, shape index: {}]
  %s4 = sld [smem:[#allocation0]]
  $region34: #{tpu_custom_call.1} parent=0
    _
  %s6 = ssub.s32 1, %s4
  %s7 = scalar_select 0, %s6, %s4
  $region1: #{tpu_custom_call.1} parent=0
    #allocation2 [shape = 'u8[4096]{0}', space=vmem, size = 0x1000, scoped, tag = 'input window, operand 0, single buffered']
    #allocation3 [shape = 's32[1]{0}', space=sflag, size = 0x4, scoped, tag = 'scoped memory for tpu_custom_call.1']
    #allocation4 [shape = 's32[1]{0}', space=sflag, size = 0x4, scoped, tag = 'scoped memory for tpu_custom_call.1']
    #allocation5 [shape = 'u8[32768]{0}', space=vmem, size = 0x8000, scoped, tag = 'input window, operand 1, single buffered']
    #allocation6 [shape = 's32[1]{0}', space=sflag, size = 0x4, scoped, tag = 'scoped memory for tpu_custom_call.1']
    #allocation7 [shape = 'u8[32768]{0}', space=vmem, size = 0x8000, scoped, tag = 'input window, operand 2, single buffered']
    #allocation8 [shape = 'u8[4096]{0}', space=vmem, size = 0x1000, scoped, tag = 'output window, operand 0, single buffered']
    %8 = vsyncpa [#allocation3], 0
    %9 = vsyncpa [#allocation6], 0
    %10 = vsyncpa [#allocation4], 0
    // Predicated region
    $region2: #{tpu_custom_call.1} parent=1 // pred_check
      _
    $region3: #{tpu_custom_call.1} parent=1 // pred_check_branch
      %12 = sbr.rel (0) target = $region5
    $region4: #{tpu_custom_call.1} parent=1 // pred_region
      %s14 = ssub.s32 128, 128
      %15 = vsyncadd [#allocation3], %s14
      %s17 = sshll.u32 [#allocation2], 4
      %s18 = int_to_ptr.vmem [resolvable:$true] %s17
      %20 = dma.hbm_to_vmem [thread:$0]  %s0, 128, %s18, [#allocation3]
    $region5: #{tpu_custom_call.1} parent=1 // pred_fallthru
      _
    // Predicated region
    $region6: #{tpu_custom_call.1} parent=1 // pred_check
      _
    $region7: #{tpu_custom_call.1} parent=1 // pred_check_branch
      %22 = sbr.rel (0) target = $region9
    $region8: #{tpu_custom_call.1} parent=1 // pred_region
      %s24 = ssub.s32 1024, 1024
      %25 = vsyncadd [#allocation6], %s24
      %s26 = sshll.u32 [#allocation5], 4
      %s27 = int_to_ptr.vmem [resolvable:$true] %s26
      %32 = dma.hbm_to_vmem [thread:$0]  %s1, 1024, %s27, [#allocation6], 128, 128, 8
    $region9: #{tpu_custom_call.1} parent=1 // pred_fallthru
      _
    // Predicated region
    $region10: #{tpu_custom_call.1} parent=1 // pred_check
      _
    $region11: #{tpu_custom_call.1} parent=1 // pred_check_branch
      %34 = sbr.rel (0) target = $region13
    $region12: #{tpu_custom_call.1} parent=1 // pred_region
      %s36 = ssub.s32 1024, 1024
      %37 = vsyncadd [#allocation6], %s36
      %s38 = sshll.u32 [#allocation7], 4
      %s39 = int_to_ptr.vmem [resolvable:$true] %s38
      %44 = dma.hbm_to_vmem [thread:$0]  %s2, 1024, %s39, [#allocation6], 128, 128, 8
    $region13: #{tpu_custom_call.1} parent=1 // pred_fallthru
      _
    // Predicated region
    $region14: #{tpu_custom_call.1} parent=1 // pred_check
      _
    $region15: #{tpu_custom_call.1} parent=1 // pred_check_branch
      %46 = sbr.rel (0) target = $region17
    $region16: #{tpu_custom_call.1} parent=1 // pred_region
      %47 = dma.done [#allocation3], 128
    $region17: #{tpu_custom_call.1} parent=1 // pred_fallthru
      _
    // Predicated region
    $region18: #{tpu_custom_call.1} parent=1 // pred_check
      _
    $region19: #{tpu_custom_call.1} parent=1 // pred_check_branch
      %49 = sbr.rel (0) target = $region21
    $region20: #{tpu_custom_call.1} parent=1 // pred_region
      %50 = dma.done [#allocation6], 1024
    $region21: #{tpu_custom_call.1} parent=1 // pred_fallthru
      _
    // Predicated region
    $region22: #{tpu_custom_call.1} parent=1 // pred_check
      _
    $region23: #{tpu_custom_call.1} parent=1 // pred_check_branch
      %52 = sbr.rel (0) target = $region25
    $region24: #{tpu_custom_call.1} parent=1 // pred_region
      %53 = dma.done [#allocation6], 1024
    $region25: #{tpu_custom_call.1} parent=1 // pred_fallthru
      _
    %v54 = vld [vmem:[#allocation2] sm:$0xff]
    %v55 = vld [vmem:[#allocation5] sm:$0xff]
    %v56 = vld [vmem:[#allocation5 + $0x8] sm:$0xff]
    %v57 = vld [vmem:[#allocation5 + $0x10] sm:$0xff]
    %v58 = vld [vmem:[#allocation5 + $0x18] sm:$0xff]
    %v59 = vld [vmem:[#allocation5 + $0x20] sm:$0xff]
    %v60 = vld [vmem:[#allocation5 + $0x28] sm:$0xff]
    %v61 = vld [vmem:[#allocation5 + $0x30] sm:$0xff]
    %v62 = vld [vmem:[#allocation5 + $0x38] sm:$0xff]
    %v63 = vld [vmem:[#allocation7] sm:$0xff]
    %v64 = vld [vmem:[#allocation7 + $0x8] sm:$0xff]
    %v65 = vld [vmem:[#allocation7 + $0x10] sm:$0xff]
    %v66 = vld [vmem:[#allocation7 + $0x18] sm:$0xff]
    %v67 = vld [vmem:[#allocation7 + $0x20] sm:$0xff]
    %v68 = vld [vmem:[#allocation7 + $0x28] sm:$0xff]
    %v69 = vld [vmem:[#allocation7 + $0x30] sm:$0xff]
    %v70 = vld [vmem:[#allocation7 + $0x38] sm:$0xff]
    %v71 = vlaneseq
    %v72 = vand.u32 %v71, 127
    %v73 = vcvt.s32.f32 %v54
    %74 = vset.pattern.permute.xlu0 0
    %75 = vperm.xlu0 %74, %v54
    %v76 = vpop.permute.xlu0 %75
    %vm77 = vcmp.eq.s32.totalorder %v72, %v76
    %v78 = vsel %vm77, 1, 0
    %v79 = vcvt.s32.f32 %v78
    %vm80 = vcmask 261120
    %v81 = vsel %vm80, %v73, 0.0
    %82 = vadd.xlane.f32.xlu0 %v81
    %v83 = vpop.xlane.xlu0 %82
    %v84 = vsub.f32 %v83, %v73
    %v85 = vrcp.pop %v84
    %v87 = vsel %vm80, %v73, 0
    %89 = vmatprep.subr.mxu0 0.0
    %90 = vmatpush1.msra.mxu0 %v63
    %91 = vmatprep.subr.mxu0 0.0
    %92 = vmatpush1.msra.mxu0 %v64
    %93 = vmatprep.subr.mxu0 0.0
    %94 = vmatpush1.msra.mxu0 %v65
    %95 = vmatprep.subr.mxu0 0.0
    %96 = vmatpush1.msra.mxu0 %v66
    %97 = vmatprep.subr.mxu0 0.0
    %98 = vmatpush1.msra.mxu0 0.0
    %99 = vmatprep.subr.mxu0 0.0
    %100 = vmatpush1.msra.mxu0 0.0
    %101 = vmatprep.subr.mxu0 0.0
    %102 = vmatpush1.msra.mxu0 0.0
    %103 = vmatprep.subr.mxu0 0.0
    %104 = vmatpush1.msra.mxu0 0.0
    %105 = vmatprep.subr.mxu0 0.0
    %106 = vmatpush1.msra.mxu0 0.0
    %107 = vmatprep.subr.mxu0 0.0
    %108 = vmatpush1.msra.mxu0 0.0
    %109 = vmatprep.subr.mxu0 0.0
    %110 = vmatpush1.msra.mxu0 0.0
    %111 = vmatprep.subr.mxu0 0.0
    %112 = vmatpush1.msra.mxu0 0.0
    %113 = vmatprep.subr.mxu0 0.0
    %114 = vmatpush1.msra.mxu0 0.0
    %115 = vmatprep.subr.mxu0 0.0
    %116 = vmatpush1.msra.mxu0 0.0
    %117 = vmatprep.subr.mxu0 0.0
    %118 = vmatpush1.msra.mxu0 0.0
    %119 = vmatprep.subr.mxu0 0.0
    %120 = vmatpush1.msra.mxu0 0.0
    %121 = vmatprep.subr.mxu0 0.0
    %122 = vmatpush1.msra.mxu0 0.0
    %123 = vmatprep.subr.mxu0 0.0
    %124 = vmatpush1.msra.mxu0 0.0
    %125 = vmatprep.subr.mxu0 0.0
    %126 = vmatpush1.msra.mxu0 0.0
    %127 = vmatprep.subr.mxu0 0.0
    %128 = vmatpush1.msra.mxu0 0.0
    %129 = vmatprep.subr.mxu0 0.0
    %130 = vmatpush1.msra.mxu0 0.0
    %131 = vmatprep.subr.mxu0 0.0
    %132 = vmatpush1.msra.mxu0 0.0
    %133 = vmatprep.subr.mxu0 0.0
    %134 = vmatpush1.msra.mxu0 0.0
    %135 = vmatprep.subr.mxu0 0.0
    %136 = vmatpush1.msra.mxu0 0.0
    %137 = vmatprep.subr.mxu0 0.0
    %138 = vmatpush1.msra.mxu0 0.0
    %139 = vmatprep.subr.mxu0 0.0
    %140 = vmatpush1.msra.mxu0 0.0
    %141 = vmatprep.subr.mxu0 0.0
    %142 = vmatpush1.msra.mxu0 0.0
    %143 = vmatprep.subr.mxu0 0.0
    %144 = vmatpush1.msra.mxu0 0.0
    %145 = vmatprep.subr.mxu0 0.0
    %146 = vmatpush1.msra.mxu0 0.0
    %147 = vmatprep.subr.mxu0 0.0
    %148 = vmatpush1.msra.mxu0 0.0
    %149 = vmatprep.subr.mxu0 0.0
    %150 = vmatpush1.msra.mxu0 0.0
    %151 = vmatprep.subr.mxu0 0.0
    %152 = vmatpush1.msra.mxu0 0.0
    %153 = vmatprep.mubr.f32.mxu0 0.0
    %154 = vmatmul.mubr.f32.gmra.mrb[0].mxu0 %v87
    %v155 = vpop.f32.mrb[0].mxu0
    %v156 = vadd.f32 0.0, %v155
    %v157 = vpop.f32.mrb[0].mxu0
    %158 = vdwg.mxu0
    %vm159 = vcmp.ge.s32.totalorder %v72, 32
    %vm160 = vcmp.lt.s32.totalorder %v72, 64
    %vm161 = vmand %vm159, %vm160
    %163 = vset.pattern.permute.xlu0 0
    %164 = vperm.xlu0 %163, %v85
    %v165 = vpop.permute.xlu0 %164
    %v167 = vmul.f32 %v156, %v165
    %v168 = vsel %vm161, %v167, %v156
    %v170 = vsel %vm80, %v79, 0
    %172 = vmatprep.subr.mxu0 0.0
    %173 = vmatpush1.msra.mxu0 %v55
    %174 = vmatprep.subr.mxu0 0.0
    %175 = vmatpush1.msra.mxu0 %v56
    %176 = vmatprep.subr.mxu0 0.0
    %177 = vmatpush1.msra.mxu0 %v57
    %178 = vmatprep.subr.mxu0 0.0
    %179 = vmatpush1.msra.mxu0 %v58
    %180 = vmatprep.subr.mxu0 0.0
    %181 = vmatpush1.msra.mxu0 0.0
    %182 = vmatprep.subr.mxu0 0.0
    %183 = vmatpush1.msra.mxu0 0.0
    %184 = vmatprep.subr.mxu0 0.0
    %185 = vmatpush1.msra.mxu0 0.0
    %186 = vmatprep.subr.mxu0 0.0
    %187 = vmatpush1.msra.mxu0 0.0
    %188 = vmatprep.subr.mxu0 0.0
    %189 = vmatpush1.msra.mxu0 0.0
    %190 = vmatprep.subr.mxu0 0.0
    %191 = vmatpush1.msra.mxu0 0.0
    %192 = vmatprep.subr.mxu0 0.0
    %193 = vmatpush1.msra.mxu0 0.0
    %194 = vmatprep.subr.mxu0 0.0
    %195 = vmatpush1.msra.mxu0 0.0
    %196 = vmatprep.subr.mxu0 0.0
    %197 = vmatpush1.msra.mxu0 0.0
    %198 = vmatprep.subr.mxu0 0.0
    %199 = vmatpush1.msra.mxu0 0.0
    %200 = vmatprep.subr.mxu0 0.0
    %201 = vmatpush1.msra.mxu0 0.0
    %202 = vmatprep.subr.mxu0 0.0
    %203 = vmatpush1.msra.mxu0 0.0
    %204 = vmatprep.subr.mxu0 0.0
    %205 = vmatpush1.msra.mxu0 0.0
    %206 = vmatprep.subr.mxu0 0.0
    %207 = vmatpush1.msra.mxu0 0.0
    %208 = vmatprep.subr.mxu0 0.0
    %209 = vmatpush1.msra.mxu0 0.0
    %210 = vmatprep.subr.mxu0 0.0
    %211 = vmatpush1.msra.mxu0 0.0
    %212 = vmatprep.subr.mxu0 0.0
    %213 = vmatpush1.msra.mxu0 0.0
    %214 = vmatprep.subr.mxu0 0.0
    %215 = vmatpush1.msra.mxu0 0.0
    %216 = vmatprep.subr.mxu0 0.0
    %217 = vmatpush1.msra.mxu0 0.0
    %218 = vmatprep.subr.mxu0 0.0
    %219 = vmatpush1.msra.mxu0 0.0
    %220 = vmatprep.subr.mxu0 0.0
    %221 = vmatpush1.msra.mxu0 0.0
    %222 = vmatprep.subr.mxu0 0.0
    %223 = vmatpush1.msra.mxu0 0.0
    %224 = vmatprep.subr.mxu0 0.0
    %225 = vmatpush1.msra.mxu0 0.0
    %226 = vmatprep.subr.mxu0 0.0
    %227 = vmatpush1.msra.mxu0 0.0
    %228 = vmatprep.subr.mxu0 0.0
    %229 = vmatpush1.msra.mxu0 0.0
    %230 = vmatprep.subr.mxu0 0.0
    %231 = vmatpush1.msra.mxu0 0.0
    %232 = vmatprep.subr.mxu0 0.0
    %233 = vmatpush1.msra.mxu0 0.0
    %234 = vmatprep.subr.mxu0 0.0
    %235 = vmatpush1.msra.mxu0 0.0
    %236 = vmatprep.mubr.f32.mxu0 0.0
    %237 = vmatmul.mubr.f32.gmra.mrb[0].mxu0 %v170
    %v238 = vpop.f32.mrb[0].mxu0
    %v239 = vadd.f32 %v168, %v238
    %v240 = vpop.f32.mrb[0].mxu0
    %241 = vdwg.mxu0
    %242 = vset.pattern.permute.xlu0 32
    %243 = vperm.xlu0 %242, %v54
    %v244 = vpop.permute.xlu0 %243
    %vm245 = vcmp.eq.s32.totalorder %v72, %v244
    %v246 = vsel %vm245, 1, 0
    %v247 = vcvt.s32.f32 %v246
    %v249 = vsel %vm80, %v247, 0
    %251 = vmatprep.subr.mxu0 0.0
    %252 = vmatpush1.msra.mxu0 %v59
    %253 = vmatprep.subr.mxu0 0.0
    %254 = vmatpush1.msra.mxu0 %v60
    %255 = vmatprep.subr.mxu0 0.0
    %256 = vmatpush1.msra.mxu0 %v61
    %257 = vmatprep.subr.mxu0 0.0
    %258 = vmatpush1.msra.mxu0 %v62
    %259 = vmatprep.subr.mxu0 0.0
    %260 = vmatpush1.msra.mxu0 0.0
    %261 = vmatprep.subr.mxu0 0.0
    %262 = vmatpush1.msra.mxu0 0.0
    %263 = vmatprep.subr.mxu0 0.0
    %264 = vmatpush1.msra.mxu0 0.0
    %265 = vmatprep.subr.mxu0 0.0
    %266 = vmatpush1.msra.mxu0 0.0
    %267 = vmatprep.subr.mxu0 0.0
    %268 = vmatpush1.msra.mxu0 0.0
    %269 = vmatprep.subr.mxu0 0.0
    %270 = vmatpush1.msra.mxu0 0.0
    %271 = vmatprep.subr.mxu0 0.0
    %272 = vmatpush1.msra.mxu0 0.0
    %273 = vmatprep.subr.mxu0 0.0
    %274 = vmatpush1.msra.mxu0 0.0
    %275 = vmatprep.subr.mxu0 0.0
    %276 = vmatpush1.msra.mxu0 0.0
    %277 = vmatprep.subr.mxu0 0.0
    %278 = vmatpush1.msra.mxu0 0.0
    %279 = vmatprep.subr.mxu0 0.0
    %280 = vmatpush1.msra.mxu0 0.0
    %281 = vmatprep.subr.mxu0 0.0
    %282 = vmatpush1.msra.mxu0 0.0
    %283 = vmatprep.subr.mxu0 0.0
    %284 = vmatpush1.msra.mxu0 0.0
    %285 = vmatprep.subr.mxu0 0.0
    %286 = vmatpush1.msra.mxu0 0.0
    %287 = vmatprep.subr.mxu0 0.0
    %288 = vmatpush1.msra.mxu0 0.0
    %289 = vmatprep.subr.mxu0 0.0
    %290 = vmatpush1.msra.mxu0 0.0
    %291 = vmatprep.subr.mxu0 0.0
    %292 = vmatpush1.msra.mxu0 0.0
    %293 = vmatprep.subr.mxu0 0.0
    %294 = vmatpush1.msra.mxu0 0.0
    %295 = vmatprep.subr.mxu0 0.0
    %296 = vmatpush1.msra.mxu0 0.0
    %297 = vmatprep.subr.mxu0 0.0
    %298 = vmatpush1.msra.mxu0 0.0
    %299 = vmatprep.subr.mxu0 0.0
    %300 = vmatpush1.msra.mxu0 0.0
    %301 = vmatprep.subr.mxu0 0.0
    %302 = vmatpush1.msra.mxu0 0.0
    %303 = vmatprep.subr.mxu0 0.0
    %304 = vmatpush1.msra.mxu0 0.0
    %305 = vmatprep.subr.mxu0 0.0
    %306 = vmatpush1.msra.mxu0 0.0
    %307 = vmatprep.subr.mxu0 0.0
    %308 = vmatpush1.msra.mxu0 0.0
    %309 = vmatprep.subr.mxu0 0.0
    %310 = vmatpush1.msra.mxu0 0.0
    %311 = vmatprep.subr.mxu0 0.0
    %312 = vmatpush1.msra.mxu0 0.0
    %313 = vmatprep.subr.mxu0 0.0
    %314 = vmatpush1.msra.mxu0 0.0
    %315 = vmatprep.mubr.f32.mxu0 0.0
    %316 = vmatmul.mubr.f32.gmra.mrb[0].mxu0 %v249
    %v317 = vpop.f32.mrb[0].mxu0
    %v318 = vadd.f32 0.0, %v317
    %v319 = vpop.f32.mrb[0].mxu0
    %320 = vdwg.mxu0
    %v321 = vadd.f32 %v239, %v318
    %322 = vrot.lane.b32.xlu0 %v73, 96
    %v323 = vpop.permute.xlu0 %322
    %v325 = vsel %vm80, %v323, 0.0
    %326 = vadd.xlane.f32.xlu0 %v325
    %v327 = vpop.xlane.xlu0 %326
    %v328 = vsub.f32 %v327, %v73
    %v329 = vrcp.pop %v328
    %v330 = vsel %vm80, %v323, 0
    %332 = vmatprep.subr.mxu0 0.0
    %333 = vmatpush1.msra.mxu0 %v67
    %334 = vmatprep.subr.mxu0 0.0
    %335 = vmatpush1.msra.mxu0 %v68
    %336 = vmatprep.subr.mxu0 0.0
    %337 = vmatpush1.msra.mxu0 %v69
    %338 = vmatprep.subr.mxu0 0.0
    %339 = vmatpush1.msra.mxu0 %v70
    %340 = vmatprep.subr.mxu0 0.0
    %341 = vmatpush1.msra.mxu0 0.0
    %342 = vmatprep.subr.mxu0 0.0
    %343 = vmatpush1.msra.mxu0 0.0
    %344 = vmatprep.subr.mxu0 0.0
    %345 = vmatpush1.msra.mxu0 0.0
    %346 = vmatprep.subr.mxu0 0.0
    %347 = vmatpush1.msra.mxu0 0.0
    %348 = vmatprep.subr.mxu0 0.0
    %349 = vmatpush1.msra.mxu0 0.0
    %350 = vmatprep.subr.mxu0 0.0
    %351 = vmatpush1.msra.mxu0 0.0
    %352 = vmatprep.subr.mxu0 0.0
    %353 = vmatpush1.msra.mxu0 0.0
    %354 = vmatprep.subr.mxu0 0.0
    %355 = vmatpush1.msra.mxu0 0.0
    %356 = vmatprep.subr.mxu0 0.0
    %357 = vmatpush1.msra.mxu0 0.0
    %358 = vmatprep.subr.mxu0 0.0
    %359 = vmatpush1.msra.mxu0 0.0
    %360 = vmatprep.subr.mxu0 0.0
    %361 = vmatpush1.msra.mxu0 0.0
    %362 = vmatprep.subr.mxu0 0.0
    %363 = vmatpush1.msra.mxu0 0.0
    %364 = vmatprep.subr.mxu0 0.0
    %365 = vmatpush1.msra.mxu0 0.0
    %366 = vmatprep.subr.mxu0 0.0
    %367 = vmatpush1.msra.mxu0 0.0
    %368 = vmatprep.subr.mxu0 0.0
    %369 = vmatpush1.msra.mxu0 0.0
    %370 = vmatprep.subr.mxu0 0.0
    %371 = vmatpush1.msra.mxu0 0.0
    %372 = vmatprep.subr.mxu0 0.0
    %373 = vmatpush1.msra.mxu0 0.0
    %374 = vmatprep.subr.mxu0 0.0
    %375 = vmatpush1.msra.mxu0 0.0
    %376 = vmatprep.subr.mxu0 0.0
    %377 = vmatpush1.msra.mxu0 0.0
    %378 = vmatprep.subr.mxu0 0.0
    %379 = vmatpush1.msra.mxu0 0.0
    %380 = vmatprep.subr.mxu0 0.0
    %381 = vmatpush1.msra.mxu0 0.0
    %382 = vmatprep.subr.mxu0 0.0
    %383 = vmatpush1.msra.mxu0 0.0
    %384 = vmatprep.subr.mxu0 0.0
    %385 = vmatpush1.msra.mxu0 0.0
    %386 = vmatprep.subr.mxu0 0.0
    %387 = vmatpush1.msra.mxu0 0.0
    %388 = vmatprep.subr.mxu0 0.0
    %389 = vmatpush1.msra.mxu0 0.0
    %390 = vmatprep.subr.mxu0 0.0
    %391 = vmatpush1.msra.mxu0 0.0
    %392 = vmatprep.subr.mxu0 0.0
    %393 = vmatpush1.msra.mxu0 0.0
    %394 = vmatprep.subr.mxu0 0.0
    %395 = vmatpush1.msra.mxu0 0.0
    %396 = vmatprep.mubr.f32.mxu0 0.0
    %397 = vmatmul.mubr.f32.gmra.mrb[0].mxu0 %v330
    %v398 = vpop.f32.mrb[0].mxu0
    %v399 = vadd.f32 0.0, %v398
    %v400 = vpop.f32.mrb[0].mxu0
    %401 = vdwg.mxu0
    %vm402 = vcmp.ge.s32.totalorder %v72, 96
    %vm403 = vcmp.lt.s32.totalorder %v72, 128
    %vm404 = vmand %vm402, %vm403
    %406 = vset.pattern.permute.xlu0 32
    %407 = vperm.xlu0 %406, %v329
    %v408 = vpop.permute.xlu0 %407
    %v410 = vmul.f32 %v399, %v408
    %v411 = vsel %vm404, %v410, %v399
    %v412 = vadd.f32 %v321, %v411
    %413 = vst [vmem:[#allocation8] sm:$0xff] %v412
    // Predicated region
    $region26: #{tpu_custom_call.1} parent=1 // pred_check
      _
    $region27: #{tpu_custom_call.1} parent=1 // pred_check_branch
      %415 = sbr.rel (0) target = $region29
    $region28: #{tpu_custom_call.1} parent=1 // pred_region
      %s417 = ssub.s32 128, 128
      %418 = vsyncadd [#allocation4], %s417
      %s420 = sshll.u32 [#allocation8], 4
      %s421 = int_to_ptr.vmem [resolvable:$true] %s420
      %423 = dma.vmem_to_hbm [thread:$0]  %s421, 128, %s3, [#allocation4]
    $region29: #{tpu_custom_call.1} parent=1 // pred_fallthru
      _
    // Predicated region
    $region30: #{tpu_custom_call.1} parent=1 // pred_check
      _
    $region31: #{tpu_custom_call.1} parent=1 // pred_check_branch
      %425 = sbr.rel (0) target = $region33
    $region32: #{tpu_custom_call.1} parent=1 // pred_region
      %426 = dma.done [#allocation4], 128
    $region33: #{tpu_custom_call.1} parent=1 // pred_fallthru
      _
    %427 = vsyncpa [#allocation3], 1
    %428 = vsyncpa [#allocation6], 1
    %429 = vsyncpa [#allocation4], 1

</llo_original>
